<compile_context>
chip_gen: v6e
topology: v6e:2x2x1
jax: 0.10.0
libtpu: 0.0.40
codegen_flags: <defaults>
</compile_context>

<pallas_src>
import functools

import jax
import jax.numpy as jnp
from jax.experimental import pallas as pl
from jax.experimental.pallas import tpu as pltpu

_LANE = 128


def _round_up(n, m):
    return ((n + m - 1) // m) * m


def _choose_tiles(b, d, itemsize,
                  step_bytes_target=2 * 1024 * 1024,
                  stream_budget_bytes=12 * 1024 * 1024):
    """Pick (tb, tk) batch/feature tiles.

    tb (batch tile; the lane axis of the [C, tb] logits slab) targets
    ~step_bytes_target of *actual* x HBM bytes per grid step so the ~0.35 us
    per-step overhead amortizes away, while keeping >= 2 batch tiles whenever
    possible so the "parallel" axis shards across v7x's two TensorCores.

    tk (feature/K tile) keeps the double-buffered, lane-padded x stream under
    stream_budget_bytes -- conservative against v7x's 64 MiB VMEM (32 MiB
    default scoped) and therefore also safe on v5e/v6e's 128 MiB.
    """
    # ---- batch tile --------------------------------------------------------
    row_bytes = max(d * itemsize, 1)
    tb = _round_up(max(step_bytes_target // row_bytes, 1), _LANE)
    if b >= 512:
        tb = max(tb, 512)
    if b > _LANE:
        # Never use a tile wildly larger than the batch; keep nb >= 2 so the
        # two v7x TensorCores both get work.
        tb = min(tb, _round_up((b + 1) // 2, _LANE))
    else:
        tb = _LANE
    tb = max(tb, _LANE)

    # ---- feature (K) tile --------------------------------------------------
    # One VMEM x buffer is lane-padded: tb * round_up(tk, 128) * itemsize.
    def stream_bytes(tk, tb_):
        return 2 * tb_ * _round_up(tk, _LANE) * itemsize  # double-buffered

    candidates = [d] + [c for c in (4096, 2048, 1024, 512, 256, 128)
                        if c < d and d % c == 0]
    tk = next((c for c in candidates if stream_bytes(c, tb) <= stream_budget_bytes),
              None)
    if tk is None:
        # TODO(synk): large D not a multiple of 128 cannot be K-tiled without
        # wrapper-side feature padding; shrink the batch tile instead.
        tk = candidates[-1]
        while tb > _LANE and stream_bytes(tk, tb) > stream_budget_bytes:
            tb = max(_LANE, _round_up(tb // 2, _LANE))
    return tb, tk


def _energy_kernel(x_ref, w_ref, b_ref, o_ref, acc_ref, *, stabilize):
    k = pl.program_id(1)

    @pl.when(k == 0)
    def _():
        acc_ref[...] = jnp.zeros_like(acc_ref)

    # Partial logits^T: W k-tile [C, tk] contracted against the native-layout
    # x tile [tb, tk] over the shared feature axis -> [C, tb].  Batch stays on
    # the 128-wide lane axis; any transpose Mosaic inserts for the contraction
    # rides the otherwise-idle XLU slot.
    acc_ref[...] += jax.lax.dot_general(
        w_ref[...], x_ref[...],
        dimension_numbers=(((1,), (1,)), ((), ())),
        preferred_element_type=jnp.float32,
    )

    @pl.when(k == pl.num_programs(1) - 1)
    def _():
        logits_t = acc_ref[...] + b_ref[...]          # [C, tb], bias broadcast over lanes
        if stabilize:
            # Optional stabilized path (not the torch default): max rides the XLU.
            m = jnp.max(logits_t, axis=0, keepdims=True)
            s = jnp.sum(jnp.exp(logits_t - m), axis=0, keepdims=True)
            o_ref[...] = jnp.log(s) + m
        else:
            # Unstabilized on purpose: matches torch.log(sum(exp(...))) exactly.
            s = jnp.sum(jnp.exp(logits_t), axis=0, keepdims=True)   # [1, tb]
            o_ref[...] = jnp.log(s)


def energy_model(x, w, b, *, stabilize=False):
    """x: [B, D] (f32/bf16), w: [C, D] (PyTorch Linear layout), b: [C] -> y: [B] f32."""
    B, D = x.shape
    C = w.shape[0]
    itemsize = jnp.dtype(x.dtype).itemsize

    tb, tk = _choose_tiles(B, D, itemsize)
    nb = pl.cdiv(B, tb)       # ragged tail handled by masked partial blocks
    nk = D // tk              # tk always divides D

    b2d = b.reshape(C, 1).astype(jnp.float32)   # resident bias column

    cost = pl.CostEstimate(
        flops=2 * B * D * C,
        transcendentals=B * (C + 1),             # exp per class + log per row
        bytes_accessed=(B * D + C * D) * itemsize + (C + B) * 4,
    )

    out = pl.pallas_call(
        functools.partial(_energy_kernel, stabilize=stabilize),
        out_shape=jax.ShapeDtypeStruct((1, B), jnp.float32),
        grid_spec=pltpu.PrefetchScalarGridSpec(
            num_scalar_prefetch=0,
            grid=(nb, nk),                                    # reduction axis last
            in_specs=[
                pl.BlockSpec((tb, tk), lambda i, k: (i, k)),  # x: native layout, streams
                pl.BlockSpec((C, tk), lambda i, k: (0, k)),   # W: native [C, D]
                pl.BlockSpec((C, 1), lambda i, k: (0, 0)),    # bias: VMEM-resident
            ],
            out_specs=pl.BlockSpec((1, tb), lambda i, k: (0, i)),
            scratch_shapes=[pltpu.VMEM((C, tb), jnp.float32)],  # logits^T accumulator
        ),
        compiler_params=pltpu.CompilerParams(
            dimension_semantics=("parallel", "arbitrary"),    # batch over TCs, K serial
            vmem_limit_bytes=32 * 1024 * 1024,                # safe on v5e/v6e/v7x
        ),
        cost_estimate=cost,
    )(x, w, b2d)

    return out[0]


if __name__ == "__main__":
    # Energy head over a Linear(D=32 -> C=16) model.  B=1000 (~128 KiB of x,
    # still tiny) exercises the real tiled path: tb=512, grid=(2, 1), a ragged
    # masked last batch tile, and >= 2 "parallel" steps so the v7x megacore
    # actually splits the work.
    B, D, C = 1000, 32, 16

    key = jax.random.PRNGKey(0)
    kx, kw, kb = jax.random.split(key, 3)

    x = jax.random.normal(kx, (B, D), dtype=jnp.float32)
    # Inner Linear(D, C) parameters in native PyTorch layout: W [C, D], b [C].
    w = 0.1 * jax.random.normal(kw, (C, D), dtype=jnp.float32)
    b = 0.1 * jax.random.normal(kb, (C,), dtype=jnp.float32)

    y = jax.block_until_ready(jax.jit(energy_model)(x, w, b))

    # Pure-JAX reference (same unstabilized semantics as the torch module).
    logits_ref = x @ w.T + b
    y_ref = jnp.log(jnp.sum(jnp.exp(logits_ref), axis=1))

    assert y.shape == (B,)
    err = float(jnp.max(jnp.abs(y - y_ref)))
    assert jnp.allclose(y, y_ref, atol=1e-4, rtol=1e-4), err

    print("KERNEL_OK")
</pallas_src>

<mosaic_0001>
module attributes {stable_mosaic.version = 11 : i64} {
  func.func @_energy_kernel(%arg0: i32, %arg1: i32, %arg2: memref<512x32xf32, #tpu.memory_space<vmem>>, %arg3: memref<16x32xf32, #tpu.memory_space<vmem>>, %arg4: memref<16x1xf32, #tpu.memory_space<vmem>>, %arg5: memref<1x512xf32, #tpu.memory_space<vmem>>, %arg6: memref<16x512xf32, #tpu.memory_space<vmem>>) attributes {dimension_semantics = [#tpu.dimension_semantics<parallel>, #tpu.dimension_semantics<arbitrary>], iteration_bounds = array<i64: 2, 1>, scalar_prefetch = 0 : i64, scratch_operands = 1 : i64, tpu.core_type = #tpu.core_type<tc>, window_params = [{transform_indices = @transform_0, window_bounds = array<i64: 512, 32>}, {transform_indices = @transform_1, window_bounds = array<i64: 16, 32>}, {pipeline_mode = #tpu.pipeline_mode<synchronous>, transform_indices = @transform_2, window_bounds = array<i64: 16, 1>}, {transform_indices = @transform_3, window_bounds = array<i64: 1, 512>}]} {
    %c0_i32 = arith.constant 0 : i32
    %0 = arith.cmpi eq, %arg1, %c0_i32 : i32
    %1 = arith.extui %0 : i1 to i32
    %c0_i32_0 = arith.constant 0 : i32
    %2 = arith.cmpi ne, %1, %c0_i32_0 : i32
    scf.if %2 {
      %cst_10 = arith.constant 0.000000e+00 : f32
      %12 = vector.broadcast %cst_10 : f32 to vector<16x512xf32>
      %c0_11 = arith.constant 0 : index
      %c0_12 = arith.constant 0 : index
      %13 = vector.load %arg6[%c0_11, %c0_12] : memref<16x512xf32, #tpu.memory_space<vmem>>, vector<16x512xf32>
      tpu.vector_store %arg6[%c0_11, %c0_12], %12 {strides = array<i32>} : memref<16x512xf32, #tpu.memory_space<vmem>>, vector<16x512xf32>,
    } else {
    }
    %c0 = arith.constant 0 : index
    %c0_1 = arith.constant 0 : index
    %3 = vector.load %arg6[%c0, %c0_1] : memref<16x512xf32, #tpu.memory_space<vmem>>, vector<16x512xf32>
    %c0_2 = arith.constant 0 : index
    %c0_3 = arith.constant 0 : index
    %4 = vector.load %arg3[%c0_2, %c0_3] : memref<16x32xf32, #tpu.memory_space<vmem>>, vector<16x32xf32>
    %c0_4 = arith.constant 0 : index
    %c0_5 = arith.constant 0 : index
    %5 = vector.load %arg2[%c0_4, %c0_5] : memref<512x32xf32, #tpu.memory_space<vmem>>, vector<512x32xf32>
    %cst = arith.constant dense<0.000000e+00> : vector<16x512xf32>
    %6 = tpu.matmul %4, %5, %cst {dimension_numbers = #tpu.dot_dimension_numbers<[1], [1], [0], [0], [0, 0, 1, 0], [], []>} : vector<16x32xf32>, vector<512x32xf32>, vector<16x512xf32> -> vector<16x512xf32>
    %7 = arith.addf %3, %6 : vector<16x512xf32>
    %c0_6 = arith.constant 0 : index
    %c0_7 = arith.constant 0 : index
    %8 = vector.load %arg6[%c0_6, %c0_7] : memref<16x512xf32, #tpu.memory_space<vmem>>, vector<16x512xf32>
    tpu.vector_store %arg6[%c0_6, %c0_7], %7 {strides = array<i32>} : memref<16x512xf32, #tpu.memory_space<vmem>>, vector<16x512xf32>,
    %c0_i32_8 = arith.constant 0 : i32
    %9 = arith.cmpi eq, %arg1, %c0_i32_8 : i32
    %10 = arith.extui %9 : i1 to i32
    %c0_i32_9 = arith.constant 0 : i32
    %11 = arith.cmpi ne, %10, %c0_i32_9 : i32
    scf.if %11 {
      %c0_10 = arith.constant 0 : index
      %c0_11 = arith.constant 0 : index
      %12 = vector.load %arg6[%c0_10, %c0_11] : memref<16x512xf32, #tpu.memory_space<vmem>>, vector<16x512xf32>
      %c0_12 = arith.constant 0 : index
      %c0_13 = arith.constant 0 : index
      %13 = vector.load %arg4[%c0_12, %c0_13] : memref<16x1xf32, #tpu.memory_space<vmem>>, vector<16x1xf32>
      %14 = vector.broadcast %13 : vector<16x1xf32> to vector<16x512xf32>
      %15 = arith.addf %12, %14 : vector<16x512xf32>
      %16 = math.exp %15 : vector<16x512xf32>
      %cst_14 = arith.constant dense<0.000000e+00> : vector<512xf32>
      %17 = vector.multi_reduction <add>, %16, %cst_14 [0] : vector<16x512xf32> to vector<512xf32>
      %18 = vector.shape_cast %17 : vector<512xf32> to vector<1x512xf32>
      %19 = math.log %18 : vector<1x512xf32>
      %c0_15 = arith.constant 0 : index
      %c0_16 = arith.constant 0 : index
      %20 = vector.load %arg5[%c0_15, %c0_16] : memref<1x512xf32, #tpu.memory_space<vmem>>, vector<1x512xf32>
      tpu.vector_store %arg5[%c0_15, %c0_16], %19 {strides = array<i32>} : memref<1x512xf32, #tpu.memory_space<vmem>>, vector<1x512xf32>,
    } else {
    }
    return
  }
  func.func @transform_0(%arg0: i32, %arg1: i32) -> (i32, i32) {
    %c0_i32 = arith.constant 0 : i32
    return %arg0, %arg1 : i32, i32
  }
  func.func @transform_1(%arg0: i32, %arg1: i32) -> (i32, i32) {
    %c0_i32 = arith.constant 0 : i32
    %c0_i32_0 = arith.constant 0 : i32
    return %c0_i32, %arg1 : i32, i32
  }
  func.func @transform_2(%arg0: i32, %arg1: i32) -> (i32, i32) {
    %c0_i32 = arith.constant 0 : i32
    %c0_i32_0 = arith.constant 0 : i32
    %c0_i32_1 = arith.constant 0 : i32
    return %c0_i32, %c0_i32_0 : i32, i32
  }
  func.func @transform_3(%arg0: i32, %arg1: i32) -> (i32, i32) {
    %c0_i32 = arith.constant 0 : i32
    %c0_i32_0 = arith.constant 0 : i32
    return %c0_i32, %arg0 : i32, i32
  }
}

</mosaic_0001>

<llo_original>
// kernel: energy_model.1
$region0: #{energy_model.1}
  #allocation0 [shape = 'u32[]', space=smem, size = 0x4, offset = 0x4, fixed_abs, tag = 'smem constant byte address 0x4 - core index']
  #allocation1 [shape = 'u32[144,128]{1,0:T(1,128)}', space=vmem, size = 0x12000, scoped, tag = 'internal scratch']
  #allocation2 [shape = 'f32[16,512]{1,0:T(8,128)}', space=vmem, size = 0x8000, scoped, tag = 'scratch operand']
  %s0 = inlined_call_operand.vmem [shape: f32[1000,32], index: 0, kind: input, shape index: {}]
  %s1 = inlined_call_operand.vmem [shape: f32[16,32], index: 1, kind: input, shape index: {}]
  %s2 = inlined_call_operand.vmem [shape: f32[16,1], index: 2, kind: input, shape index: {}]
  %s3 = inlined_call_operand.hbm [shape: f32[1,1000], index: 3, kind: output, shape index: {}]
  %s4 = sld [smem:[#allocation0]]
  $region53: #{energy_model.1} parent=0
    _
  %s6 = ssub.s32 1, %s4
  %s7 = scalar_select 0, %s6, %s4
  $region1: #{energy_model.1} parent=0
    #allocation3 [shape = 'u8[4096]{0}', space=vmem, size = 0x1000, scoped, tag = 'output window, operand 0']
    #allocation4 [shape = 's32[2]{0}', space=sflag, size = 0x8, scoped, tag = 'scoped memory for energy_model.1']
    %8 = vsyncpa [#allocation4], 0
    %s9 = scalar_lea.sflag [#allocation4], 1
    %10 = vsyncpa %s9, 0
    loop: start=0, step=1, limit=4
    $region2: #{energy_model.1} parent=1 // loop_pre_header
      _
    $region3: #{energy_model.1} parent=1 // loop_header
      %s12 = sphi 0, %s16
      %p13 = scmp.ge.s32.totalorder %s12, 4
      %s19 = sphi 0, %s31
      %s20 = sphi 0, %s27
      %s21 = sphi 0, %s19
      %s22 = sphi 0, %s20
      %s23 = sphi 0, %s21
      %s24 = sphi 0, %s22
      %s36 = sphi 0, %s38
      %s39 = sphi 0, %s36
      %s40 = sphi 0, %s39
      %s56 = sphi 0, %s40
      %s62 = sphi 0, %s64
      %s65 = sphi 0, %s62
      %s66 = sphi 0, %s65
      %s82 = sphi 0, %s66
      %s86 = sphi 0, %s86
      %s88 = sphi 0, %s86
      %s89 = sphi 0, %s88
      %s103 = sphi 0, %s89
      %s109 = sphi 0, %s111
      %s112 = sphi 0, %s109
      %s113 = sphi 0, %s112
      %s129 = sphi 0, %s113
    $region4: #{energy_model.1} parent=1 // loop_header_branch
      %15 = sbr.rel (%p13) target = $region8
    $region5: #{energy_model.1} parent=1 // loop_body
      %s17 = ssub.s32 %s12, 1
      %s18 = ssub.s32 %s12, 2
      %s25 = sadd.s32 1, %s20
      %p26 = scmp.ge.s32.totalorder %s25, 1
      %s27 = scalar_select %p26, 0, %s25
      %s28 = sadd.s32 1, %s19
      %s29 = scalar_select %p26, %s28, %s19
      %p30 = scmp.ge.s32.totalorder %s29, 2
      %s31 = scalar_select %p30, 0, %s29
      %s32 = ssub.s32 %s19, %s31
      %s33 = ssub.s32 %s20, %s27
      %s34 = sor.u32 %s32, %s33
      %p35 = scmp.eq.s32.totalorder %s34, 0
      %s37 = sadd.s32 %s36, 1
      %s38 = scalar_select %p35, %s36, %s37
      %p41 = pneg %p35
      %p42 = scmp.eq.s32.totalorder %s12, 1
      %p43 = por %p41, %p42
      %p44 = scmp.ne.s32.totalorder %s36, %s39
      %p45 = scmp.eq.s32.totalorder %s12, 0
      %p46 = por %p44, %p45
      %p47 = scmp.ne.s32.totalorder %s36, %s39
      %p48 = scmp.eq.s32.totalorder %s17, 1
      %p49 = por %p47, %p48
      %p50 = scmp.ne.s32.totalorder %s39, %s40
      %p51 = scmp.eq.s32.totalorder %s17, 0
      %p52 = por %p50, %p51
      %p53 = scmp.ne.s32.totalorder %s39, %s40
      %p54 = scmp.eq.s32.totalorder %s18, 1
      %p55 = por %p53, %p54
      %p57 = scmp.ne.s32.totalorder %s40, %s56
      %p58 = scmp.eq.s32.totalorder %s18, 0
      %p59 = por %p57, %p58
      %s60 = ssub.s32 %s20, %s27
      %p61 = scmp.eq.s32.totalorder %s60, 0
      %s63 = sadd.s32 %s62, 1
      %s64 = scalar_select %p61, %s62, %s63
      %p67 = pneg %p61
      %p68 = scmp.eq.s32.totalorder %s12, 1
      %p69 = por %p67, %p68
      %p70 = scmp.ne.s32.totalorder %s62, %s65
      %p71 = scmp.eq.s32.totalorder %s12, 0
      %p72 = por %p70, %p71
      %p73 = scmp.ne.s32.totalorder %s62, %s65
      %p74 = scmp.eq.s32.totalorder %s17, 1
      %p75 = por %p73, %p74
      %p76 = scmp.ne.s32.totalorder %s65, %s66
      %p77 = scmp.eq.s32.totalorder %s17, 0
      %p78 = por %p76, %p77
      %p79 = scmp.ne.s32.totalorder %s65, %s66
      %p80 = scmp.eq.s32.totalorder %s18, 1
      %p81 = por %p79, %p80
      %p83 = scmp.ne.s32.totalorder %s66, %s82
      %p84 = scmp.eq.s32.totalorder %s18, 0
      %p85 = por %p83, %p84
      %s87 = sadd.s32 %s86, 1
      %p90 = scmp.eq.s32.totalorder %s12, 1
      %p91 = scmp.ne.s32.totalorder %s86, %s88
      %p92 = scmp.eq.s32.totalorder %s12, 0
      %p93 = por %p91, %p92
      %p94 = scmp.ne.s32.totalorder %s86, %s88
      %p95 = scmp.eq.s32.totalorder %s17, 1
      %p96 = por %p94, %p95
      %p97 = scmp.ne.s32.totalorder %s88, %s89
      %p98 = scmp.eq.s32.totalorder %s17, 0
      %p99 = por %p97, %p98
      %p100 = scmp.ne.s32.totalorder %s88, %s89
      %p101 = scmp.eq.s32.totalorder %s18, 1
      %p102 = por %p100, %p101
      %p104 = scmp.ne.s32.totalorder %s89, %s103
      %p105 = scmp.eq.s32.totalorder %s18, 0
      %p106 = por %p104, %p105
      %s107 = ssub.s32 %s19, %s31
      %p108 = scmp.eq.s32.totalorder %s107, 0
      %s110 = sadd.s32 %s109, 1
      %s111 = scalar_select %p108, %s109, %s110
      %p114 = pneg %p108
      %p115 = scmp.eq.s32.totalorder %s12, 1
      %p116 = por %p114, %p115
      %p117 = scmp.ne.s32.totalorder %s109, %s112
      %p118 = scmp.eq.s32.totalorder %s12, 0
      %p119 = por %p117, %p118
      %p120 = scmp.ne.s32.totalorder %s109, %s112
      %p121 = scmp.eq.s32.totalorder %s17, 1
      %p122 = por %p120, %p121
      %p123 = scmp.ne.s32.totalorder %s112, %s113
      %p124 = scmp.eq.s32.totalorder %s17, 0
      %p125 = por %p123, %p124
      %p126 = scmp.ne.s32.totalorder %s112, %s113
      %p127 = scmp.eq.s32.totalorder %s18, 1
      %p128 = por %p126, %p127
      %p130 = scmp.ne.s32.totalorder %s113, %s129
      %p131 = scmp.eq.s32.totalorder %s18, 0
      %p132 = por %p130, %p131
      %p133 = scmp.le.s32.totalorder 1, %s12
      %p134 = scmp.lt.s32.totalorder %s12, 3
      %p135 = pnand %p133, %p134
      %p136 = pneg %p135
      // Predicated region
      $region9: #{energy_model.1} parent=5 // pred_check
        _
      $region10: #{energy_model.1} parent=5 // pred_check_branch
        %138 = sbr.rel (%p135) target = $region12
      $region11: #{energy_model.1} parent=5 // pred_region
        %s139 = ssub.s32 %s12, 1
        // Predicated region
        $region13: #{energy_model.1} parent=11 // pred_check
          %p140 = pneg %p78
        $region14: #{energy_model.1} parent=11 // pred_check_branch
          %142 = sbr.rel (%p140) target = $region16
        $region15: #{energy_model.1} parent=11 // pred_region
          %p143 = scmp.lt.s32.totalorder %s22, 0
          %s144 = scalar_select %p143, %s22, 0
          %s145 = smul.addr %s144, 8
          %s146 = scalar_lea.vmem %s1, %s145
        $region16: #{energy_model.1} parent=11 // pred_fallthru
          _
        // Predicated region
        $region17: #{energy_model.1} parent=11 // pred_check
          %p147 = pneg %p99
        $region18: #{energy_model.1} parent=11 // pred_check_branch
          %149 = sbr.rel (%p147) target = $region20
        $region19: #{energy_model.1} parent=11 // pred_region
          _
        $region20: #{energy_model.1} parent=11 // pred_fallthru
          _
      $region12: #{energy_model.1} parent=5 // pred_fallthru
        _
      %p150 = scmp.lt.s32.totalorder %s12, 2
      // Predicated region
      $region21: #{energy_model.1} parent=5 // pred_check
        %p151 = pneg %p150
      $region22: #{energy_model.1} parent=5 // pred_check_branch
        %153 = sbr.rel (%p151) target = $region24
      $region23: #{energy_model.1} parent=5 // pred_region
        // Predicated region
        $region25: #{energy_model.1} parent=23 // pred_check
          %p154 = pneg %p46
        $region26: #{energy_model.1} parent=23 // pred_check_branch
          %156 = sbr.rel (%p154) target = $region28
        $region27: #{energy_model.1} parent=23 // pred_region
          %s157 = smul.u32 64, %s19
          %s158 = ssub.s32 125, %s157
          %p159 = scmp.lt.s32.totalorder %s158, 64
          %s160 = scalar_select %p159, %s158, 64
          %s161 = smul.u32 128, %s160
          %p162 = scmp.lt.s32.totalorder %s157, 124
          %s163 = scalar_select %p162, %s157, 124
          %p164 = scmp.lt.s32.totalorder %s20, 0
          %s165 = scalar_select %p164, %s20, 0
          %s166 = sadd.s32 %s165, %s163
          %s167 = smul.addr %s166, 8
          %s168 = scalar_lea.vmem %s0, %s167
          %s169 = smul.u32 64, %s19
          %s170 = ssub.s32 125, %s169
          %p171 = scmp.lt.s32.totalorder %s170, 64
          %s172 = scalar_select %p171, %s170, 64
          %s173 = smul.u32 128, %s172
        $region28: #{energy_model.1} parent=23 // pred_fallthru
          _
      $region24: #{energy_model.1} parent=5 // pred_fallthru
        _
      %p174 = scmp.le.s32.totalorder 1, %s12
      %p175 = scmp.lt.s32.totalorder %s12, 3
      %p176 = pnand %p174, %p175
      %p177 = pneg %p176
      // Predicated region
      $region29: #{energy_model.1} parent=5 // pred_check
        _
      $region30: #{energy_model.1} parent=5 // pred_check_branch
        %179 = sbr.rel (%p176) target = $region32
      $region31: #{energy_model.1} parent=5 // pred_region
        %s180 = ssub.s32 %s12, 1
        %s181 = smul.u32 64, %s21
        %s182 = ssub.s32 125, %s181
        %p183 = scmp.lt.s32.totalorder %s182, 64
        %s184 = scalar_select %p183, %s182, 64
        %s185 = smul.u32 128, %s184
        %p186 = scmp.lt.s32.totalorder %s181, 124
        %s187 = scalar_select %p186, %s181, 124
        %p188 = scmp.lt.s32.totalorder %s22, 0
        %s189 = scalar_select %p188, %s22, 0
        %s190 = sadd.s32 %s189, %s187
        %s191 = smul.addr %s190, 8
        %s192 = scalar_lea.vmem %s0, %s191
        %p193 = pneg %p52
        %p194 = pneg %p49
        %p195 = scmp.lt.s32.totalorder %s22, 0
        %s196 = scalar_select %p195, %s22, 0
        %s197 = smul.addr %s196, 8
        %s198 = scalar_lea.vmem %s1, %s197
        %p199 = pneg %p78
        %p200 = pneg %p75
        %p201 = pneg %p99
        %p202 = pneg %p96
        %p203 = pneg %p125
        %p204 = pneg %p122
        %s205 = sand.u32 %s112, 1
        %s206 = scalar_lea.sflag [#allocation4], %s205
        %s207 = sand.u32 %s112, 1
        %s208 = smul.addr %s207, 4
        %s209 = scalar_lea.vmem [#allocation3], %s208
        %s210 = smul.u32 64, %s21
        %s211 = ssub.s32 125, %s210
        %p212 = scmp.lt.s32.totalorder %s211, 64
        %s213 = scalar_select %p212, %s211, 64
        %s214 = smul.u32 128, %s213
        %p215 = scmp.lt.s32.totalorder %s210, 124
        %s216 = scalar_select %p215, %s210, 124
        %p217 = scmp.lt.s32.totalorder %s22, 0
        %s218 = scalar_select %p217, %s22, 0
        %s219 = sadd.s32 %s218, %s216
        %s220 = smul.addr %s219, 8
        %s221 = scalar_lea.vmem %s0, %s220
        %s222 = smul.u32 64, %s21
        %s223 = ssub.s32 125, %s222
        %p224 = scmp.lt.s32.totalorder %s223, 64
        %s225 = scalar_select %p224, %s223, 64
        %s226 = smul.u32 128, %s225
        %p227 = scmp.lt.s32.totalorder %s22, 0
        %s228 = scalar_select %p227, %s22, 0
        %s229 = smul.addr %s228, 8
        %s230 = scalar_lea.vmem %s1, %s229
        %s231 = smul.u32 4, %s21
        %p232 = scmp.eq.s32.totalorder %s22, 0
        // Predicated region
        $region33: #{energy_model.1} parent=31 // pred_check
          %p233 = pneg %p232
        $region34: #{energy_model.1} parent=31 // pred_check_branch
          %235 = sbr.rel (%p233) target = $region36
        $region35: #{energy_model.1} parent=31 // pred_region
          %236 = vst [vmem:[#allocation2] sm:$0xff] 0.0
          %237 = vst [vmem:[#allocation2 + $0x8] sm:$0xff] 0.0
          %238 = vst [vmem:[#allocation2 + $0x10] sm:$0xff] 0.0
          %239 = vst [vmem:[#allocation2 + $0x18] sm:$0xff] 0.0
          %240 = vst [vmem:[#allocation2 + $0x20] sm:$0xff] 0.0
          %241 = vst [vmem:[#allocation2 + $0x28] sm:$0xff] 0.0
          %242 = vst [vmem:[#allocation2 + $0x30] sm:$0xff] 0.0
          %243 = vst [vmem:[#allocation2 + $0x38] sm:$0xff] 0.0
        $region36: #{energy_model.1} parent=31 // pred_fallthru
          _
        %v244 = vld [vmem:[#allocation2] sm:$0xff]
        %v245 = vld [vmem:[#allocation2 + $0x8] sm:$0xff]
        %v246 = vld [vmem:[#allocation2 + $0x10] sm:$0xff]
        %v247 = vld [vmem:[#allocation2 + $0x18] sm:$0xff]
        %v248 = vld [vmem:[#allocation2 + $0x20] sm:$0xff]
        %v249 = vld [vmem:[#allocation2 + $0x28] sm:$0xff]
        %v250 = vld [vmem:[#allocation2 + $0x30] sm:$0xff]
        %v251 = vld [vmem:[#allocation2 + $0x38] sm:$0xff]
        %v252 = vld [vmem:[%s230] sm:$0xff]
        %v253 = vld [vmem:[%s230 + $0x8] sm:$0xff]
        %v254 = vld [vmem:[%s221] sm:$0xff]
        %v255 = vld [vmem:[%s221 + $0x8] sm:$0xff]
        %v256 = vld [vmem:[%s221 + $0x10] sm:$0xff]
        %v257 = vld [vmem:[%s221 + $0x18] sm:$0xff]
        %v258 = vld [vmem:[%s221 + $0x20] sm:$0xff]
        %v259 = vld [vmem:[%s221 + $0x28] sm:$0xff]
        %v260 = vld [vmem:[%s221 + $0x30] sm:$0xff]
        %v261 = vld [vmem:[%s221 + $0x38] sm:$0xff]
        %v262 = vld [vmem:[%s221 + $0x40] sm:$0xff]
        %v263 = vld [vmem:[%s221 + $0x48] sm:$0xff]
        %v264 = vld [vmem:[%s221 + $0x50] sm:$0xff]
        %v265 = vld [vmem:[%s221 + $0x58] sm:$0xff]
        %v266 = vld [vmem:[%s221 + $0x60] sm:$0xff]
        %v267 = vld [vmem:[%s221 + $0x68] sm:$0xff]
        %v268 = vld [vmem:[%s221 + $0x70] sm:$0xff]
        %v269 = vld [vmem:[%s221 + $0x78] sm:$0xff]
        %v270 = vld [vmem:[%s221 + $0x80] sm:$0xff]
        %v271 = vld [vmem:[%s221 + $0x88] sm:$0xff]
        %v272 = vld [vmem:[%s221 + $0x90] sm:$0xff]
        %v273 = vld [vmem:[%s221 + $0x98] sm:$0xff]
        %v274 = vld [vmem:[%s221 + $0xa0] sm:$0xff]
        %v275 = vld [vmem:[%s221 + $0xa8] sm:$0xff]
        %v276 = vld [vmem:[%s221 + $0xb0] sm:$0xff]
        %v277 = vld [vmem:[%s221 + $0xb8] sm:$0xff]
        %v278 = vld [vmem:[%s221 + $0xc0] sm:$0xff]
        %v279 = vld [vmem:[%s221 + $0xc8] sm:$0xff]
        %v280 = vld [vmem:[%s221 + $0xd0] sm:$0xff]
        %v281 = vld [vmem:[%s221 + $0xd8] sm:$0xff]
        %v282 = vld [vmem:[%s221 + $0xe0] sm:$0xff]
        %v283 = vld [vmem:[%s221 + $0xe8] sm:$0xff]
        %v284 = vld [vmem:[%s221 + $0xf0] sm:$0xff]
        %v285 = vld [vmem:[%s221 + $0xf8] sm:$0xff]
        %v286 = vld [vmem:[%s221 + $0x100] sm:$0xff]
        %v287 = vld [vmem:[%s221 + $0x108] sm:$0xff]
        %v288 = vld [vmem:[%s221 + $0x110] sm:$0xff]
        %v289 = vld [vmem:[%s221 + $0x118] sm:$0xff]
        %v290 = vld [vmem:[%s221 + $0x120] sm:$0xff]
        %v291 = vld [vmem:[%s221 + $0x128] sm:$0xff]
        %v292 = vld [vmem:[%s221 + $0x130] sm:$0xff]
        %v293 = vld [vmem:[%s221 + $0x138] sm:$0xff]
        %v294 = vld [vmem:[%s221 + $0x140] sm:$0xff]
        %v295 = vld [vmem:[%s221 + $0x148] sm:$0xff]
        %v296 = vld [vmem:[%s221 + $0x150] sm:$0xff]
        %v297 = vld [vmem:[%s221 + $0x158] sm:$0xff]
        %v298 = vld [vmem:[%s221 + $0x160] sm:$0xff]
        %v299 = vld [vmem:[%s221 + $0x168] sm:$0xff]
        %v300 = vld [vmem:[%s221 + $0x170] sm:$0xff]
        %v301 = vld [vmem:[%s221 + $0x178] sm:$0xff]
        %v302 = vld [vmem:[%s221 + $0x180] sm:$0xff]
        %v303 = vld [vmem:[%s221 + $0x188] sm:$0xff]
        %v304 = vld [vmem:[%s221 + $0x190] sm:$0xff]
        %v305 = vld [vmem:[%s221 + $0x198] sm:$0xff]
        %v306 = vld [vmem:[%s221 + $0x1a0] sm:$0xff]
        %v307 = vld [vmem:[%s221 + $0x1a8] sm:$0xff]
        %v308 = vld [vmem:[%s221 + $0x1b0] sm:$0xff]
        %v309 = vld [vmem:[%s221 + $0x1b8] sm:$0xff]
        %v310 = vld [vmem:[%s221 + $0x1c0] sm:$0xff]
        %v311 = vld [vmem:[%s221 + $0x1c8] sm:$0xff]
        %v312 = vld [vmem:[%s221 + $0x1d0] sm:$0xff]
        %v313 = vld [vmem:[%s221 + $0x1d8] sm:$0xff]
        %v314 = vld [vmem:[%s221 + $0x1e0] sm:$0xff]
        %v315 = vld [vmem:[%s221 + $0x1e8] sm:$0xff]
        %v316 = vld [vmem:[%s221 + $0x1f0] sm:$0xff]
        %v317 = vld [vmem:[%s221 + $0x1f8] sm:$0xff]
        %vm318 = vcmask 261120
        %v320 = vsel %vm318, %v252, 0
        %v323 = vsel %vm318, %v253, 0
        %v326 = vsel %vm318, %v254, 0
        %v329 = vsel %vm318, %v255, 0
        %v332 = vsel %vm318, %v256, 0
        %v335 = vsel %vm318, %v257, 0
        %v338 = vsel %vm318, %v258, 0
        %v341 = vsel %vm318, %v259, 0
        %v344 = vsel %vm318, %v260, 0
        %v347 = vsel %vm318, %v261, 0
        %v350 = vsel %vm318, %v262, 0
        %v353 = vsel %vm318, %v263, 0
        %v356 = vsel %vm318, %v264, 0
        %v359 = vsel %vm318, %v265, 0
        %v362 = vsel %vm318, %v266, 0
        %v365 = vsel %vm318, %v267, 0
        %v368 = vsel %vm318, %v268, 0
        %v371 = vsel %vm318, %v269, 0
        %v374 = vsel %vm318, %v270, 0
        %v377 = vsel %vm318, %v271, 0
        %v380 = vsel %vm318, %v272, 0
        %v383 = vsel %vm318, %v273, 0
        %v386 = vsel %vm318, %v274, 0
        %v389 = vsel %vm318, %v275, 0
        %v392 = vsel %vm318, %v276, 0
        %v395 = vsel %vm318, %v277, 0
        %v398 = vsel %vm318, %v278, 0
        %v401 = vsel %vm318, %v279, 0
        %v404 = vsel %vm318, %v280, 0
        %v407 = vsel %vm318, %v281, 0
        %v410 = vsel %vm318, %v282, 0
        %v413 = vsel %vm318, %v283, 0
        %v416 = vsel %vm318, %v284, 0
        %v419 = vsel %vm318, %v285, 0
        %v422 = vsel %vm318, %v286, 0
        %v425 = vsel %vm318, %v287, 0
        %v428 = vsel %vm318, %v288, 0
        %v431 = vsel %vm318, %v289, 0
        %v434 = vsel %vm318, %v290, 0
        %v437 = vsel %vm318, %v291, 0
        %v440 = vsel %vm318, %v292, 0
        %v443 = vsel %vm318, %v293, 0
        %v446 = vsel %vm318, %v294, 0
        %v449 = vsel %vm318, %v295, 0
        %v452 = vsel %vm318, %v296, 0
        %v455 = vsel %vm318, %v297, 0
        %v458 = vsel %vm318, %v298, 0
        %v461 = vsel %vm318, %v299, 0
        %v464 = vsel %vm318, %v300, 0
        %v467 = vsel %vm318, %v301, 0
        %v470 = vsel %vm318, %v302, 0
        %v473 = vsel %vm318, %v303, 0
        %v476 = vsel %vm318, %v304, 0
        %v479 = vsel %vm318, %v305, 0
        %v482 = vsel %vm318, %v306, 0
        %v485 = vsel %vm318, %v307, 0
        %v488 = vsel %vm318, %v308, 0
        %v491 = vsel %vm318, %v309, 0
        %v494 = vsel %vm318, %v310, 0
        %v497 = vsel %vm318, %v311, 0
        %v500 = vsel %vm318, %v312, 0
        %v503 = vsel %vm318, %v313, 0
        %v506 = vsel %vm318, %v314, 0
        %v509 = vsel %vm318, %v315, 0
        %v512 = vsel %vm318, %v316, 0
        %v515 = vsel %vm318, %v317, 0
        %517 = vmatprep.subr.mxu0 0.0
        %518 = vmatpush1.xpose.msra.mxu0 %v371
        %519 = vmatprep.subr.mxu0 0.0
        %520 = vmatpush1.xpose.msra.mxu0 %v368
        %521 = vmatprep.subr.mxu0 0.0
        %522 = vmatpush1.xpose.msra.mxu0 %v365
        %523 = vmatprep.subr.mxu0 0.0
        %524 = vmatpush1.xpose.msra.mxu0 %v362
        %525 = vmatprep.subr.mxu0 0.0
        %526 = vmatpush1.xpose.msra.mxu0 %v359
        %527 = vmatprep.subr.mxu0 0.0
        %528 = vmatpush1.xpose.msra.mxu0 %v356
        %529 = vmatprep.subr.mxu0 0.0
        %530 = vmatpush1.xpose.msra.mxu0 %v353
        %531 = vmatprep.subr.mxu0 0.0
        %532 = vmatpush1.xpose.msra.mxu0 %v350
        %533 = vmatprep.subr.mxu0 0.0
        %534 = vmatpush1.xpose.msra.mxu0 %v347
        %535 = vmatprep.subr.mxu0 0.0
        %536 = vmatpush1.xpose.msra.mxu0 %v344
        %537 = vmatprep.subr.mxu0 0.0
        %538 = vmatpush1.xpose.msra.mxu0 %v341
        %539 = vmatprep.subr.mxu0 0.0
        %540 = vmatpush1.xpose.msra.mxu0 %v338
        %541 = vmatprep.subr.mxu0 0.0
        %542 = vmatpush1.xpose.msra.mxu0 %v335
        %543 = vmatprep.subr.mxu0 0.0
        %544 = vmatpush1.xpose.msra.mxu0 %v332
        %545 = vmatprep.subr.mxu0 0.0
        %546 = vmatpush1.xpose.msra.mxu0 %v329
        %547 = vmatprep.subr.mxu0 0.0
        %548 = vmatpush1.xpose.msra.mxu0 %v326
        %549 = vmatprep.subr.mxu0 0.0
        %550 = vmatpush2.xpose.msra.mxu0 %v419
        %551 = vmatprep.subr.mxu0 0.0
        %552 = vmatpush2.xpose.msra.mxu0 %v416
        %553 = vmatprep.subr.mxu0 0.0
        %554 = vmatpush2.xpose.msra.mxu0 %v413
        %555 = vmatprep.subr.mxu0 0.0
        %556 = vmatpush2.xpose.msra.mxu0 %v410
        %557 = vmatprep.subr.mxu0 0.0
        %558 = vmatpush2.xpose.msra.mxu0 %v407
        %559 = vmatprep.subr.mxu0 0.0
        %560 = vmatpush2.xpose.msra.mxu0 %v404
        %561 = vmatprep.subr.mxu0 0.0
        %562 = vmatpush2.xpose.msra.mxu0 %v401
        %563 = vmatprep.subr.mxu0 0.0
        %564 = vmatpush2.xpose.msra.mxu0 %v398
        %565 = vmatprep.subr.mxu0 0.0
        %566 = vmatpush2.xpose.msra.mxu0 %v395
        %567 = vmatprep.subr.mxu0 0.0
        %568 = vmatpush2.xpose.msra.mxu0 %v392
        %569 = vmatprep.subr.mxu0 0.0
        %570 = vmatpush2.xpose.msra.mxu0 %v389
        %571 = vmatprep.subr.mxu0 0.0
        %572 = vmatpush2.xpose.msra.mxu0 %v386
        %573 = vmatprep.subr.mxu0 0.0
        %574 = vmatpush2.xpose.msra.mxu0 %v383
        %575 = vmatprep.subr.mxu0 0.0
        %576 = vmatpush2.xpose.msra.mxu0 %v380
        %577 = vmatprep.subr.mxu0 0.0
        %578 = vmatpush2.xpose.msra.mxu0 %v377
        %579 = vmatprep.subr.mxu0 0.0
        %580 = vmatpush2.xpose.msra.mxu0 %v374
        %581 = vmatprep.mubr.f32.mxu0 0.0
        %582 = vmatmul.mubr.f32.gmra.mxu0 %v320
        %v583 = vpop.f32.mrf.mxu0
        %v584 = vadd.f32 0.0, %v583
        %v585 = vpop.f32.mrf.mxu0
        %v586 = vadd.f32 0.0, %v585
        %587 = vmatprep.mubr.f32.mxu0 0.0
        %588 = vmatmul.mubr.f32.gmra.mxu0 %v323
        %v589 = vpop.f32.mrf.mxu0
        %v590 = vadd.f32 0.0, %v589
        %v591 = vpop.f32.mrf.mxu0
        %v592 = vadd.f32 0.0, %v591
        %593 = vdwg.mxu0
        %594 = vmatprep.subr.mxu0 0.0
        %595 = vmatpush1.xpose.msra.mxu0 %v467
        %596 = vmatprep.subr.mxu0 0.0
        %597 = vmatpush1.xpose.msra.mxu0 %v464
        %598 = vmatprep.subr.mxu0 0.0
        %599 = vmatpush1.xpose.msra.mxu0 %v461
        %600 = vmatprep.subr.mxu0 0.0
        %601 = vmatpush1.xpose.msra.mxu0 %v458
        %602 = vmatprep.subr.mxu0 0.0
        %603 = vmatpush1.xpose.msra.mxu0 %v455
        %604 = vmatprep.subr.mxu0 0.0
        %605 = vmatpush1.xpose.msra.mxu0 %v452
        %606 = vmatprep.subr.mxu0 0.0
        %607 = vmatpush1.xpose.msra.mxu0 %v449
        %608 = vmatprep.subr.mxu0 0.0
        %609 = vmatpush1.xpose.msra.mxu0 %v446
        %610 = vmatprep.subr.mxu0 0.0
        %611 = vmatpush1.xpose.msra.mxu0 %v443
        %612 = vmatprep.subr.mxu0 0.0
        %613 = vmatpush1.xpose.msra.mxu0 %v440
        %614 = vmatprep.subr.mxu0 0.0
        %615 = vmatpush1.xpose.msra.mxu0 %v437
        %616 = vmatprep.subr.mxu0 0.0
        %617 = vmatpush1.xpose.msra.mxu0 %v434
        %618 = vmatprep.subr.mxu0 0.0
        %619 = vmatpush1.xpose.msra.mxu0 %v431
        %620 = vmatprep.subr.mxu0 0.0
        %621 = vmatpush1.xpose.msra.mxu0 %v428
        %622 = vmatprep.subr.mxu0 0.0
        %623 = vmatpush1.xpose.msra.mxu0 %v425
        %624 = vmatprep.subr.mxu0 0.0
        %625 = vmatpush1.xpose.msra.mxu0 %v422
        %626 = vmatprep.subr.mxu0 0.0
        %627 = vmatpush2.xpose.msra.mxu0 %v515
        %628 = vmatprep.subr.mxu0 0.0
        %629 = vmatpush2.xpose.msra.mxu0 %v512
        %630 = vmatprep.subr.mxu0 0.0
        %631 = vmatpush2.xpose.msra.mxu0 %v509
        %632 = vmatprep.subr.mxu0 0.0
        %633 = vmatpush2.xpose.msra.mxu0 %v506
        %634 = vmatprep.subr.mxu0 0.0
        %635 = vmatpush2.xpose.msra.mxu0 %v503
        %636 = vmatprep.subr.mxu0 0.0
        %637 = vmatpush2.xpose.msra.mxu0 %v500
        %638 = vmatprep.subr.mxu0 0.0
        %639 = vmatpush2.xpose.msra.mxu0 %v497
        %640 = vmatprep.subr.mxu0 0.0
        %641 = vmatpush2.xpose.msra.mxu0 %v494
        %642 = vmatprep.subr.mxu0 0.0
        %643 = vmatpush2.xpose.msra.mxu0 %v491
        %644 = vmatprep.subr.mxu0 0.0
        %645 = vmatpush2.xpose.msra.mxu0 %v488
        %646 = vmatprep.subr.mxu0 0.0
        %647 = vmatpush2.xpose.msra.mxu0 %v485
        %648 = vmatprep.subr.mxu0 0.0
        %649 = vmatpush2.xpose.msra.mxu0 %v482
        %650 = vmatprep.subr.mxu0 0.0
        %651 = vmatpush2.xpose.msra.mxu0 %v479
        %652 = vmatprep.subr.mxu0 0.0
        %653 = vmatpush2.xpose.msra.mxu0 %v476
        %654 = vmatprep.subr.mxu0 0.0
        %655 = vmatpush2.xpose.msra.mxu0 %v473
        %656 = vmatprep.subr.mxu0 0.0
        %657 = vmatpush2.xpose.msra.mxu0 %v470
        %658 = vmatprep.mubr.f32.mxu0 0.0
        %659 = vmatmul.mubr.f32.gmra.mxu0 %v320
        %v660 = vpop.f32.mrf.mxu0
        %v661 = vadd.f32 0.0, %v660
        %v662 = vpop.f32.mrf.mxu0
        %v663 = vadd.f32 0.0, %v662
        %664 = vmatprep.mubr.f32.mxu0 0.0
        %665 = vmatmul.mubr.f32.gmra.mxu0 %v323
        %v666 = vpop.f32.mrf.mxu0
        %v667 = vadd.f32 0.0, %v666
        %v668 = vpop.f32.mrf.mxu0
        %v669 = vadd.f32 0.0, %v668
        %670 = vdwg.mxu0
        %v671 = vadd.f32 %v244, %v584
        %v672 = vadd.f32 %v245, %v586
        %v673 = vadd.f32 %v246, %v661
        %v674 = vadd.f32 %v247, %v663
        %v675 = vadd.f32 %v248, %v590
        %v676 = vadd.f32 %v249, %v592
        %v677 = vadd.f32 %v250, %v667
        %v678 = vadd.f32 %v251, %v669
        %679 = vst [vmem:[#allocation2] sm:$0xff] %v671
        %680 = vst [vmem:[#allocation2 + $0x8] sm:$0xff] %v672
        %681 = vst [vmem:[#allocation2 + $0x10] sm:$0xff] %v673
        %682 = vst [vmem:[#allocation2 + $0x18] sm:$0xff] %v674
        %683 = vst [vmem:[#allocation2 + $0x20] sm:$0xff] %v675
        %684 = vst [vmem:[#allocation2 + $0x28] sm:$0xff] %v676
        %685 = vst [vmem:[#allocation2 + $0x30] sm:$0xff] %v677
        %686 = vst [vmem:[#allocation2 + $0x38] sm:$0xff] %v678
        // Predicated region
        $region37: #{energy_model.1} parent=31 // pred_check
          %p687 = pneg %p232
        $region38: #{energy_model.1} parent=31 // pred_check_branch
          %689 = sbr.rel (%p687) target = $region40
        $region39: #{energy_model.1} parent=31 // pred_region
          %v690 = vld [vmem:[#allocation2] sm:$0xff]
          %v691 = vld [vmem:[#allocation2 + $0x8] sm:$0xff]
          %v692 = vld [vmem:[#allocation2 + $0x10] sm:$0xff]
          %v693 = vld [vmem:[#allocation2 + $0x18] sm:$0xff]
          %v694 = vld [vmem:[#allocation2 + $0x20] sm:$0xff]
          %v695 = vld [vmem:[#allocation2 + $0x28] sm:$0xff]
          %v696 = vld [vmem:[#allocation2 + $0x30] sm:$0xff]
          %v697 = vld [vmem:[#allocation2 + $0x38] sm:$0xff]
          %v698 = vld [vmem:[%s2] sm:$0xff]
          %v699 = vld [vmem:[%s2 + $0x8] sm:$0xff]
          %701 = vset.pattern.permute.xlu0 0
          %702 = vperm.xlu0 %701, %v698
          %v703 = vpop.permute.xlu0 %702
          %706 = vset.pattern.permute.xlu0 0
          %707 = vperm.xlu0 %706, %v699
          %v708 = vpop.permute.xlu0 %707
          %v710 = vadd.f32 %v690, %v703
          %v711 = vadd.f32 %v691, %v703
          %v712 = vadd.f32 %v692, %v703
          %v713 = vadd.f32 %v693, %v703
          %v714 = vadd.f32 %v694, %v708
          %v715 = vadd.f32 %v695, %v708
          %v716 = vadd.f32 %v696, %v708
          %v717 = vadd.f32 %v697, %v708
          %v718 = vmul.f32 %v710, 1.442695
          %v719 = vpow.pop %v718
          %v720 = vmul.f32 %v711, 1.442695
          %v721 = vpow.pop %v720
          %v722 = vmul.f32 %v712, 1.442695
          %v723 = vpow.pop %v722
          %v724 = vmul.f32 %v713, 1.442695
          %v725 = vpow.pop %v724
          %v726 = vmul.f32 %v714, 1.442695
          %v727 = vpow.pop %v726
          %v728 = vmul.f32 %v715, 1.442695
          %v729 = vpow.pop %v728
          %v730 = vmul.f32 %v716, 1.442695
          %v731 = vpow.pop %v730
          %v732 = vmul.f32 %v717, 1.442695
          %v733 = vpow.pop %v732
          %v734 = vadd.f32 %v719, %v727
          %v735 = vrot.slane %v734, 4
          %v736 = vadd.f32 %v734, %v735
          %v737 = vrot.slane %v736, 2
          %v738 = vadd.f32 %v736, %v737
          %v739 = vrot.slane %v738, 1
          %v740 = vadd.f32 %v738, %v739
          %v741 = vadd.f32 %v721, %v729
          %v742 = vrot.slane %v741, 4
          %v743 = vadd.f32 %v741, %v742
          %v744 = vrot.slane %v743, 2
          %v745 = vadd.f32 %v743, %v744
          %v746 = vrot.slane %v745, 1
          %v747 = vadd.f32 %v745, %v746
          %v748 = vadd.f32 %v723, %v731
          %v749 = vrot.slane %v748, 4
          %v750 = vadd.f32 %v748, %v749
          %v751 = vrot.slane %v750, 2
          %v752 = vadd.f32 %v750, %v751
          %v753 = vrot.slane %v752, 1
          %v754 = vadd.f32 %v752, %v753
          %v755 = vadd.f32 %v725, %v733
          %v756 = vrot.slane %v755, 4
          %v757 = vadd.f32 %v755, %v756
          %v758 = vrot.slane %v757, 2
          %v759 = vadd.f32 %v757, %v758
          %v760 = vrot.slane %v759, 1
          %v761 = vadd.f32 %v759, %v760
          %v762 = vlog2.pop %v740
          %v763 = vmul.f32 %v762, 0.6931472
          %v764 = vlog2.pop %v747
          %v765 = vmul.f32 %v764, 0.6931472
          %v766 = vlog2.pop %v754
          %v767 = vmul.f32 %v766, 0.6931472
          %v768 = vlog2.pop %v761
          %v769 = vmul.f32 %v768, 0.6931472
          %v774 = vcombine.low %v763, %v765
          %v775 = vcombine.low %v767, %v769
          %v777 = vunpack.c.l.s4 1966171168
          %v778 = vunpack.c.0.s8 %v777
          %v779 = vlaneseq
          %v780 = vshrl.u32 %v779, 7
          %v781 = vsub.s32 %v778, %v780
          %v782 = vrot.slane %v774, %v781
          %v784 = vunpack.c.l.s4 1966171168
          %v785 = vunpack.c.0.s8 %v784
          %v786 = vlaneseq
          %v787 = vshrl.u32 %v786, 7
          %v788 = vsub.s32 %v785, %v787
          %v789 = vrot.slane %v775, %v788
          %v790 = vcombine.low %v782, %v789
          %v792 = vunpack.c.l.s4 1966171168
          %v793 = vunpack.c.0.s8 %v792
          %v794 = vlaneseq
          %v795 = vshrl.u32 %v794, 7
          %v796 = vsub.s32 %v793, %v795
          %v797 = vrot.slane %v790, %v796
          %v799 = vlaneseq
          %vm800 = vcmp.ge.s32.totalorder %v799, 0
          %vm801 = vcmp.lt.s32.totalorder %v799, 512
          %vm802 = vmand %vm800, %vm801
          %803 = vst.msk [vmem:[%s209] sm:$0xf] %vm802, %v797
        $region40: #{energy_model.1} parent=31 // pred_fallthru
          _
        %s804 = sand.u32 %s112, 1
        %s805 = scalar_lea.sflag [#allocation4], %s804
        %s806 = sand.u32 %s112, 1
        %s807 = smul.addr %s806, 4
        %s808 = scalar_lea.vmem [#allocation3], %s807
        // Predicated region
        $region41: #{energy_model.1} parent=31 // pred_check
          %p809 = pneg %p122
        $region42: #{energy_model.1} parent=31 // pred_check_branch
          %811 = sbr.rel (%p809) target = $region44
        $region43: #{energy_model.1} parent=31 // pred_region
          %s812 = smul.u32 4, %s21
          %s814 = ssub.s32 64, 64
          %815 = vsyncadd %s805, %s814
          %s816 = smul.addr %s812, 16
          %s817 = scalar_lea.hbm %s3, %s816
          %s819 = sshll.u32 %s808, 4
          %s820 = int_to_ptr.vmem [resolvable:$true] %s819
          %822 = dma.vmem_to_hbm [thread:$0]  %s820, 64, %s817, %s805
        $region44: #{energy_model.1} parent=31 // pred_fallthru
          _
      $region32: #{energy_model.1} parent=5 // pred_fallthru
        _
      %p823 = scmp.le.s32.totalorder 2, %s12
      // Predicated region
      $region45: #{energy_model.1} parent=5 // pred_check
        %p824 = pneg %p823
      $region46: #{energy_model.1} parent=5 // pred_check_branch
        %826 = sbr.rel (%p824) target = $region48
      $region47: #{energy_model.1} parent=5 // pred_region
        %s827 = ssub.s32 %s12, 2
        // Predicated region
        $region49: #{energy_model.1} parent=47 // pred_check
          %p828 = pneg %p128
        $region50: #{energy_model.1} parent=47 // pred_check_branch
          %830 = sbr.rel (%p828) target = $region52
        $region51: #{energy_model.1} parent=47 // pred_region
          %s831 = sand.u32 %s113, 1
          %s832 = scalar_lea.sflag [#allocation4], %s831
          %s833 = sand.u32 %s113, 1
          %s834 = smul.addr %s833, 4
          %s835 = scalar_lea.vmem [#allocation3], %s834
          %836 = dma.done %s832, 64
        $region52: #{energy_model.1} parent=47 // pred_fallthru
          _
      $region48: #{energy_model.1} parent=5 // pred_fallthru
        _
    $region6: #{energy_model.1} parent=1 // loop_footer
      %s16 = sadd.s32 1, %s12
    $region7: #{energy_model.1} parent=1 // loop_footer_branch
      %11 = sbr.rel target = $region3
    $region8: #{energy_model.1} parent=1 // loop_exit
      _
    %837 = vsyncpa [#allocation4], 1
    %s838 = scalar_lea.sflag [#allocation4], 1
    %839 = vsyncpa %s838, 1

</llo_original>
